<compile_context>
chip_gen: v5e
topology: v5e:2x2
jax: 0.10.0
libtpu: 0.0.40
codegen_flags: <defaults>
</compile_context>

<pallas_src>
import math

import jax
import jax.numpy as jnp
from jax.experimental import pallas as pl
from jax.experimental.pallas import tpu as pltpu

# Reference module uses sqrt(2 / 3.142) (not exactly pi) -- match it exactly.
_GELU_C = math.sqrt(2.0 / 3.142)


def ffn_kernel(x_ref, w1_ref, b1_ref, w2_ref, b2_ref, o_ref, acc_ref):
    k = pl.program_id(1)

    @pl.when(k == 0)
    def _():
        acc_ref[...] = jnp.zeros_like(acc_ref)

    x = x_ref[...].astype(jnp.float32)                       # (tm, d_model)
    w1 = w1_ref[...].astype(jnp.float32)                     # (d_model, tf)
    b1 = b1_ref[...].astype(jnp.float32)                     # (1, tf)

    h = jnp.dot(x, w1, preferred_element_type=jnp.float32) + b1   # (tm, tf)
    # tanh-approximation GELU exactly as in the reference PyTorch module.
    g = 0.5 * h * (1.0 + jnp.tanh(_GELU_C * (h + 0.044715 * h * h * h)))
    # TODO(synk): dropout is identity in eval mode; no RNG mask is applied here.

    w2 = w2_ref[...].astype(jnp.float32)                     # (tf, d_model)
    acc_ref[...] += jnp.dot(g, w2, preferred_element_type=jnp.float32)

    @pl.when(k == pl.num_programs(1) - 1)
    def _():
        b2 = b2_ref[...].astype(jnp.float32)                 # (1, d_model)
        o_ref[...] = (acc_ref[...] + b2).astype(o_ref.dtype)


def feed_forward(x, w1, b1, w2, b2, *, row_tile=256, ff_tile=512):
    """x: (..., d_model); w1: (d_model, d_ff); b1: (d_ff,);
       w2: (d_ff, d_model); b2: (d_model,).  Returns same shape as x."""
    orig_shape = x.shape
    d_model = orig_shape[-1]
    d_ff = w1.shape[1]

    rows = 1
    for s in orig_shape[:-1]:
        rows *= s
    x2 = x.reshape(rows, d_model)

    # Large row tile (amortizes per-grid-step overhead), always a multiple of 8.
    tm = min(row_tile, max(8, ((rows + 7) // 8) * 8))
    rows_p = pl.cdiv(rows, tm) * tm
    if rows_p != rows:
        # Pad rows instead of shrinking the tile (never violate the (8,128) rule
        # or degenerate to tiny tiles for awkward row counts).
        x2 = jnp.pad(x2, ((0, rows_p - rows), (0, 0)))

    # d_ff tile: divisor of d_ff that is a multiple of 128, or the full d_ff.
    if d_ff <= ff_tile:
        tf = d_ff
    else:
        tf = d_ff
        for t in range(ff_tile, 127, -128):
            if d_ff % t == 0:
                tf = t
                break

    b1_2 = b1.reshape(1, d_ff)
    b2_2 = b2.reshape(1, d_model)

    grid = (rows_p // tm, d_ff // tf)

    out2 = pl.pallas_call(
        ffn_kernel,
        out_shape=jax.ShapeDtypeStruct((rows_p, d_model), x.dtype),
        grid_spec=pltpu.PrefetchScalarGridSpec(
            num_scalar_prefetch=0,
            grid=grid,
            in_specs=[
                pl.BlockSpec((tm, d_model), lambda i, k: (i, 0)),   # x rows
                pl.BlockSpec((d_model, tf), lambda i, k: (0, k)),   # W1 column slab
                pl.BlockSpec((1, tf), lambda i, k: (0, k)),         # b1 slab
                pl.BlockSpec((tf, d_model), lambda i, k: (k, 0)),   # W2 row slab
                pl.BlockSpec((1, d_model), lambda i, k: (0, 0)),    # b2 (resident)
            ],
            out_specs=pl.BlockSpec((tm, d_model), lambda i, k: (i, 0)),
            scratch_shapes=[pltpu.VMEM((tm, d_model), jnp.float32)],
        ),
        compiler_params=pltpu.CompilerParams(
            dimension_semantics=("parallel", "arbitrary")),
    )(x2, w1, b1_2, w2, b2_2)

    return out2[:rows].reshape(orig_shape)


if __name__ == "__main__":
    key = jax.random.PRNGKey(0)
    batch, seq, d_model = 2, 8, 32
    d_ff = 4 * d_model

    k_x, k_w1, k_b1, k_w2, k_b2 = jax.random.split(key, 5)
    x = jax.random.normal(k_x, (batch, seq, d_model), dtype=jnp.float32)
    # PyTorch nn.Linear stores (out, in); here weights are kept (in, out) so the
    # kernel computes x @ W + b directly (equivalent to x @ W_pt.T + b).
    w1 = 0.02 * jax.random.normal(k_w1, (d_model, d_ff), dtype=jnp.float32)
    b1 = 0.02 * jax.random.normal(k_b1, (d_ff,), dtype=jnp.float32)
    w2 = 0.02 * jax.random.normal(k_w2, (d_ff, d_model), dtype=jnp.float32)
    b2 = 0.02 * jax.random.normal(k_b2, (d_model,), dtype=jnp.float32)

    out = feed_forward(x, w1, b1, w2, b2)
    out = jax.block_until_ready(out)

    # Pure-JAX reference with identical semantics (dropout = identity at eval).
    h = x @ w1 + b1
    g = 0.5 * h * (1.0 + jnp.tanh(jnp.float32(_GELU_C) * (h + 0.044715 * h ** 3)))
    ref = g @ w2 + b2
    max_err = float(jnp.max(jnp.abs(out - ref)))
    assert jnp.allclose(out, ref, atol=1e-4, rtol=1e-4), max_err

    print("KERNEL_OK")
</pallas_src>

<mosaic_0001>
module attributes {stable_mosaic.version = 11 : i64} {
  func.func @ffn_kernel(%arg0: i32, %arg1: i32, %arg2: memref<16x32xf32, #tpu.memory_space<vmem>>, %arg3: memref<32x128xf32, #tpu.memory_space<vmem>>, %arg4: memref<1x128xf32, #tpu.memory_space<vmem>>, %arg5: memref<128x32xf32, #tpu.memory_space<vmem>>, %arg6: memref<1x32xf32, #tpu.memory_space<vmem>>, %arg7: memref<16x32xf32, #tpu.memory_space<vmem>>, %arg8: memref<16x32xf32, #tpu.memory_space<vmem>>) attributes {dimension_semantics = [#tpu.dimension_semantics<parallel>, #tpu.dimension_semantics<arbitrary>], iteration_bounds = array<i64: 1, 1>, scalar_prefetch = 0 : i64, scratch_operands = 1 : i64, tpu.core_type = #tpu.core_type<tc>, window_params = [{transform_indices = @transform_0, window_bounds = array<i64: 16, 32>}, {transform_indices = @transform_1, window_bounds = array<i64: 32, 128>}, {transform_indices = @transform_2, window_bounds = array<i64: 1, 128>}, {transform_indices = @transform_3, window_bounds = array<i64: 128, 32>}, {pipeline_mode = #tpu.pipeline_mode<synchronous>, transform_indices = @transform_4, window_bounds = array<i64: 1, 32>}, {transform_indices = @transform_5, window_bounds = array<i64: 16, 32>}]} {
    %c0_i32 = arith.constant 0 : i32
    %0 = arith.cmpi eq, %arg1, %c0_i32 : i32
    %1 = arith.extui %0 : i1 to i32
    %c0_i32_0 = arith.constant 0 : i32
    %2 = arith.cmpi ne, %1, %c0_i32_0 : i32
    scf.if %2 {
      %cst_19 = arith.constant 0.000000e+00 : f32
      %30 = vector.broadcast %cst_19 : f32 to vector<16x32xf32>
      %c0_20 = arith.constant 0 : index
      %c0_21 = arith.constant 0 : index
      %31 = vector.load %arg8[%c0_20, %c0_21] : memref<16x32xf32, #tpu.memory_space<vmem>>, vector<16x32xf32>
      tpu.vector_store %arg8[%c0_20, %c0_21], %30 {strides = array<i32>} : memref<16x32xf32, #tpu.memory_space<vmem>>, vector<16x32xf32>,
    } else {
    }
    %c0 = arith.constant 0 : index
    %c0_1 = arith.constant 0 : index
    %3 = vector.load %arg2[%c0, %c0_1] : memref<16x32xf32, #tpu.memory_space<vmem>>, vector<16x32xf32>
    %c0_2 = arith.constant 0 : index
    %c0_3 = arith.constant 0 : index
    %4 = vector.load %arg3[%c0_2, %c0_3] : memref<32x128xf32, #tpu.memory_space<vmem>>, vector<32x128xf32>
    %c0_4 = arith.constant 0 : index
    %c0_5 = arith.constant 0 : index
    %5 = vector.load %arg4[%c0_4, %c0_5] : memref<1x128xf32, #tpu.memory_space<vmem>>, vector<1x128xf32>
    %cst = arith.constant dense<0.000000e+00> : vector<16x128xf32>
    %6 = tpu.matmul %3, %4, %cst {dimension_numbers = #tpu.dot_dimension_numbers<[1], [0], [0], [1], [0, 0, 1, 1], [], []>} : vector<16x32xf32>, vector<32x128xf32>, vector<16x128xf32> -> vector<16x128xf32>
    %7 = vector.broadcast %5 : vector<1x128xf32> to vector<16x128xf32>
    %8 = arith.addf %6, %7 : vector<16x128xf32>
    %cst_6 = arith.constant 5.000000e-01 : f32
    %9 = vector.broadcast %cst_6 : f32 to vector<16x128xf32>
    %10 = arith.mulf %9, %8 : vector<16x128xf32>
    %cst_7 = arith.constant 4.471500e-02 : f32
    %11 = vector.broadcast %cst_7 : f32 to vector<16x128xf32>
    %12 = arith.mulf %11, %8 : vector<16x128xf32>
    %13 = arith.mulf %12, %8 : vector<16x128xf32>
    %14 = arith.mulf %13, %8 : vector<16x128xf32>
    %15 = arith.addf %8, %14 : vector<16x128xf32>
    %cst_8 = arith.constant 0.797832846 : f32
    %16 = vector.broadcast %cst_8 : f32 to vector<16x128xf32>
    %17 = arith.mulf %16, %15 : vector<16x128xf32>
    %18 = math.tanh %17 : vector<16x128xf32>
    %cst_9 = arith.constant 1.000000e+00 : f32
    %19 = vector.broadcast %cst_9 : f32 to vector<16x128xf32>
    %20 = arith.addf %19, %18 : vector<16x128xf32>
    %21 = arith.mulf %10, %20 : vector<16x128xf32>
    %c0_10 = arith.constant 0 : index
    %c0_11 = arith.constant 0 : index
    %22 = vector.load %arg5[%c0_10, %c0_11] : memref<128x32xf32, #tpu.memory_space<vmem>>, vector<128x32xf32>
    %c0_12 = arith.constant 0 : index
    %c0_13 = arith.constant 0 : index
    %23 = vector.load %arg8[%c0_12, %c0_13] : memref<16x32xf32, #tpu.memory_space<vmem>>, vector<16x32xf32>
    %cst_14 = arith.constant dense<0.000000e+00> : vector<16x32xf32>
    %24 = tpu.matmul %21, %22, %cst_14 {dimension_numbers = #tpu.dot_dimension_numbers<[1], [0], [0], [1], [0, 0, 1, 1], [], []>} : vector<16x128xf32>, vector<128x32xf32>, vector<16x32xf32> -> vector<16x32xf32>
    %25 = arith.addf %23, %24 : vector<16x32xf32>
    %c0_15 = arith.constant 0 : index
    %c0_16 = arith.constant 0 : index
    %26 = vector.load %arg8[%c0_15, %c0_16] : memref<16x32xf32, #tpu.memory_space<vmem>>, vector<16x32xf32>
    tpu.vector_store %arg8[%c0_15, %c0_16], %25 {strides = array<i32>} : memref<16x32xf32, #tpu.memory_space<vmem>>, vector<16x32xf32>,
    %c0_i32_17 = arith.constant 0 : i32
    %27 = arith.cmpi eq, %arg1, %c0_i32_17 : i32
    %28 = arith.extui %27 : i1 to i32
    %c0_i32_18 = arith.constant 0 : i32
    %29 = arith.cmpi ne, %28, %c0_i32_18 : i32
    scf.if %29 {
      %c0_19 = arith.constant 0 : index
      %c0_20 = arith.constant 0 : index
      %30 = vector.load %arg6[%c0_19, %c0_20] : memref<1x32xf32, #tpu.memory_space<vmem>>, vector<1x32xf32>
      %c0_21 = arith.constant 0 : index
      %c0_22 = arith.constant 0 : index
      %31 = vector.load %arg8[%c0_21, %c0_22] : memref<16x32xf32, #tpu.memory_space<vmem>>, vector<16x32xf32>
      %32 = vector.broadcast %30 : vector<1x32xf32> to vector<16x32xf32>
      %33 = arith.addf %31, %32 : vector<16x32xf32>
      %c0_23 = arith.constant 0 : index
      %c0_24 = arith.constant 0 : index
      %34 = vector.load %arg7[%c0_23, %c0_24] : memref<16x32xf32, #tpu.memory_space<vmem>>, vector<16x32xf32>
      tpu.vector_store %arg7[%c0_23, %c0_24], %33 {strides = array<i32>} : memref<16x32xf32, #tpu.memory_space<vmem>>, vector<16x32xf32>,
    } else {
    }
    return
  }
  func.func @transform_0(%arg0: i32, %arg1: i32) -> (i32, i32) {
    %c0_i32 = arith.constant 0 : i32
    %c0_i32_0 = arith.constant 0 : i32
    return %arg0, %c0_i32 : i32, i32
  }
  func.func @transform_1(%arg0: i32, %arg1: i32) -> (i32, i32) {
    %c0_i32 = arith.constant 0 : i32
    %c0_i32_0 = arith.constant 0 : i32
    return %c0_i32, %arg1 : i32, i32
  }
  func.func @transform_2(%arg0: i32, %arg1: i32) -> (i32, i32) {
    %c0_i32 = arith.constant 0 : i32
    %c0_i32_0 = arith.constant 0 : i32
    return %c0_i32, %arg1 : i32, i32
  }
  func.func @transform_3(%arg0: i32, %arg1: i32) -> (i32, i32) {
    %c0_i32 = arith.constant 0 : i32
    %c0_i32_0 = arith.constant 0 : i32
    return %arg1, %c0_i32 : i32, i32
  }
  func.func @transform_4(%arg0: i32, %arg1: i32) -> (i32, i32) {
    %c0_i32 = arith.constant 0 : i32
    %c0_i32_0 = arith.constant 0 : i32
    %c0_i32_1 = arith.constant 0 : i32
    return %c0_i32, %c0_i32_0 : i32, i32
  }
  func.func @transform_5(%arg0: i32, %arg1: i32) -> (i32, i32) {
    %c0_i32 = arith.constant 0 : i32
    %c0_i32_0 = arith.constant 0 : i32
    return %arg0, %c0_i32 : i32, i32
  }
}

</mosaic_0001>

<llo_original>
// kernel: tpu_custom_call.1
$region0: #{tpu_custom_call.1}
  #allocation0 [shape = 'u32[]', space=smem, size = 0x4, offset = 0x4, fixed_abs, tag = 'smem constant byte address 0x4 - core index']
  #allocation1 [shape = 'u32[72,128]{1,0:T(1,128)}', space=vmem, size = 0x9000, scoped, tag = 'internal scratch']
  #allocation2 [shape = 'f32[16,32]{1,0:T(8,128)}', space=vmem, size = 0x2000, scoped, tag = 'scratch operand']
  %s0 = inlined_call_operand.vmem [shape: f32[16,32], index: 0, kind: input, shape index: {}]
  %s1 = inlined_call_operand.vmem [shape: f32[32,128], index: 1, kind: input, shape index: {}]
  %s2 = inlined_call_operand.vmem [shape: f32[1,128], index: 2, kind: input, shape index: {}]
  %s3 = inlined_call_operand.vmem [shape: f32[128,32], index: 3, kind: input, shape index: {}]
  %s4 = inlined_call_operand.vmem [shape: f32[1,32], index: 4, kind: input, shape index: {}]
  %s5 = inlined_call_operand.hbm [shape: f32[16,32], index: 5, kind: output, shape index: {}]
  %s6 = sld [smem:[#allocation0]]
  $region38: #{tpu_custom_call.1} parent=0
    _
  %s8 = ssub.s32 1, %s6
  %s9 = scalar_select 0, %s8, %s6
  $region1: #{tpu_custom_call.1} parent=0
    #allocation3 [shape = 'u8[8192]{0}', space=vmem, size = 0x2000, scoped, tag = 'output window, operand 0, single buffered']
    #allocation4 [shape = 's32[1]{0}', space=sflag, size = 0x4, scoped, tag = 'scoped memory for tpu_custom_call.1']
    %10 = vsyncpa [#allocation4], 0
    // Predicated region
    $region2: #{tpu_custom_call.1} parent=1 // pred_check
      _
    $region3: #{tpu_custom_call.1} parent=1 // pred_check_branch
      %12 = sbr.rel (0) target = $region5
    $region4: #{tpu_custom_call.1} parent=1 // pred_region
      _
    $region5: #{tpu_custom_call.1} parent=1 // pred_fallthru
      _
    // Predicated region
    $region6: #{tpu_custom_call.1} parent=1 // pred_check
      _
    $region7: #{tpu_custom_call.1} parent=1 // pred_check_branch
      %14 = sbr.rel (0) target = $region9
    $region8: #{tpu_custom_call.1} parent=1 // pred_region
      _
    $region9: #{tpu_custom_call.1} parent=1 // pred_fallthru
      _
    // Predicated region
    $region10: #{tpu_custom_call.1} parent=1 // pred_check
      _
    $region11: #{tpu_custom_call.1} parent=1 // pred_check_branch
      %16 = sbr.rel (0) target = $region13
    $region12: #{tpu_custom_call.1} parent=1 // pred_region
      _
    $region13: #{tpu_custom_call.1} parent=1 // pred_fallthru
      _
    // Predicated region
    $region14: #{tpu_custom_call.1} parent=1 // pred_check
      _
    $region15: #{tpu_custom_call.1} parent=1 // pred_check_branch
      %18 = sbr.rel (0) target = $region17
    $region16: #{tpu_custom_call.1} parent=1 // pred_region
      _
    $region17: #{tpu_custom_call.1} parent=1 // pred_fallthru
      _
    // Predicated region
    $region18: #{tpu_custom_call.1} parent=1 // pred_check
      _
    $region19: #{tpu_custom_call.1} parent=1 // pred_check_branch
      %20 = sbr.rel (0) target = $region21
    $region20: #{tpu_custom_call.1} parent=1 // pred_region
      _
    $region21: #{tpu_custom_call.1} parent=1 // pred_fallthru
      _
    %p21 = scmp.eq.s32.totalorder 0, 0
    // Predicated region
    $region22: #{tpu_custom_call.1} parent=1 // pred_check
      %p22 = pneg %p21
    $region23: #{tpu_custom_call.1} parent=1 // pred_check_branch
      %24 = sbr.rel (%p22) target = $region25
    $region24: #{tpu_custom_call.1} parent=1 // pred_region
      %vm25 = vcmask 261120
      %26 = vst.msk [vmem:[#allocation2] sm:$0xff] %vm25, 0.0
      %27 = vst.msk [vmem:[#allocation2 + $0x8] sm:$0xff] %vm25, 0.0
    $region25: #{tpu_custom_call.1} parent=1 // pred_fallthru
      _
    %v28 = vld [vmem:[%s0] sm:$0xff]
    %v29 = vld [vmem:[%s0 + $0x8] sm:$0xff]
    %v30 = vld [vmem:[%s1] sm:$0xff]
    %v31 = vld [vmem:[%s1 + $0x8] sm:$0xff]
    %v32 = vld [vmem:[%s1 + $0x10] sm:$0xff]
    %v33 = vld [vmem:[%s1 + $0x18] sm:$0xff]
    %v34 = vld [vmem:[%s2] sm:$0x1]
    %v36 = vperm.slane %v34, 0
    %vm38 = vcmask 261120
    %v40 = vsel %vm38, %v28, 0
    %v43 = vsel %vm38, %v29, 0
    %45 = vmatpush.msra.mxu0 0.0
    %46 = vmatpush.msra.mxu0 0.0
    %47 = vmatpush.msra.mxu0 0.0
    %48 = vmatpush.msra.mxu0 0.0
    %49 = vmatpush.msra.mxu0 0.0
    %50 = vmatpush.msra.mxu0 0.0
    %51 = vmatpush.msra.mxu0 0.0
    %52 = vmatpush.msra.mxu0 0.0
    %53 = vmatpush.msra.mxu0 0.0
    %54 = vmatpush.msra.mxu0 0.0
    %55 = vmatpush.msra.mxu0 0.0
    %56 = vmatpush.msra.mxu0 0.0
    %57 = vmatpush.msra.mxu0 %v33
    %58 = vmatpush.msra.mxu0 %v32
    %59 = vmatpush.msra.mxu0 %v31
    %60 = vmatpush.msra.mxu0 %v30
    %61 = vmatmul.f32.gmra.mxu0 %v40
    %v62 = vpop.f32.mrf.mxu0
    %v63 = vadd.f32 %v36, %v62
    %64 = vmatmul.f32.gmra.mxu0 %v43
    %v65 = vpop.f32.mrf.mxu0
    %v66 = vadd.f32 %v36, %v65
    %67 = vdwg.mxu0
    %v68 = vmul.f32 %v63, 0.5
    %v69 = vmul.f32 %v66, 0.5
    %v70 = vmul.f32 %v63, 0.044715
    %v71 = vmul.f32 %v66, 0.044715
    %v72 = vmul.f32 %v70, %v63
    %v73 = vmul.f32 %v71, %v66
    %v74 = vmul.f32 %v72, %v63
    %v75 = vmul.f32 %v73, %v66
    %v76 = vadd.f32 %v63, %v74
    %v77 = vadd.f32 %v66, %v75
    %v78 = vmul.f32 %v76, 0.79783285
    %v79 = vmul.f32 %v77, 0.79783285
    %v80 = vtanh.pop %v78
    %v81 = vtanh.pop %v79
    %v82 = vadd.f32 %v80, 1.0
    %v83 = vadd.f32 %v81, 1.0
    %v84 = vmul.f32 %v68, %v82
    %v85 = vmul.f32 %v69, %v83
    %v86 = vld [vmem:[%s3] sm:$0xff]
    %v87 = vld [vmem:[%s3 + $0x8] sm:$0xff]
    %v88 = vld [vmem:[%s3 + $0x10] sm:$0xff]
    %v89 = vld [vmem:[%s3 + $0x18] sm:$0xff]
    %v90 = vld [vmem:[%s3 + $0x20] sm:$0xff]
    %v91 = vld [vmem:[%s3 + $0x28] sm:$0xff]
    %v92 = vld [vmem:[%s3 + $0x30] sm:$0xff]
    %v93 = vld [vmem:[%s3 + $0x38] sm:$0xff]
    %v94 = vld [vmem:[%s3 + $0x40] sm:$0xff]
    %v95 = vld [vmem:[%s3 + $0x48] sm:$0xff]
    %v96 = vld [vmem:[%s3 + $0x50] sm:$0xff]
    %v97 = vld [vmem:[%s3 + $0x58] sm:$0xff]
    %v98 = vld [vmem:[%s3 + $0x60] sm:$0xff]
    %v99 = vld [vmem:[%s3 + $0x68] sm:$0xff]
    %v100 = vld [vmem:[%s3 + $0x70] sm:$0xff]
    %v101 = vld [vmem:[%s3 + $0x78] sm:$0xff]
    %v102 = vld [vmem:[#allocation2] sm:$0xff]
    %v103 = vld [vmem:[#allocation2 + $0x8] sm:$0xff]
    %104 = vmatpush.msra.mxu0 %v101
    %105 = vmatpush.msra.mxu0 %v100
    %106 = vmatpush.msra.mxu0 %v99
    %107 = vmatpush.msra.mxu0 %v98
    %108 = vmatpush.msra.mxu0 %v97
    %109 = vmatpush.msra.mxu0 %v96
    %110 = vmatpush.msra.mxu0 %v95
    %111 = vmatpush.msra.mxu0 %v94
    %112 = vmatpush.msra.mxu0 %v93
    %113 = vmatpush.msra.mxu0 %v92
    %114 = vmatpush.msra.mxu0 %v91
    %115 = vmatpush.msra.mxu0 %v90
    %116 = vmatpush.msra.mxu0 %v89
    %117 = vmatpush.msra.mxu0 %v88
    %118 = vmatpush.msra.mxu0 %v87
    %119 = vmatpush.msra.mxu0 %v86
    %120 = vmatmul.f32.gmra.mxu0 %v84
    %v121 = vpop.f32.mrf.mxu0
    %v122 = vadd.f32 0.0, %v121
    %123 = vmatmul.f32.gmra.mxu0 %v85
    %v124 = vpop.f32.mrf.mxu0
    %v125 = vadd.f32 0.0, %v124
    %126 = vdwg.mxu0
    %v127 = vadd.f32 %v102, %v122
    %v128 = vadd.f32 %v103, %v125
    %129 = vst.msk [vmem:[#allocation2] sm:$0xff] %vm38, %v127
    %130 = vst.msk [vmem:[#allocation2 + $0x8] sm:$0xff] %vm38, %v128
    // Predicated region
    $region26: #{tpu_custom_call.1} parent=1 // pred_check
      %p131 = pneg %p21
    $region27: #{tpu_custom_call.1} parent=1 // pred_check_branch
      %133 = sbr.rel (%p131) target = $region29
    $region28: #{tpu_custom_call.1} parent=1 // pred_region
      %v134 = vld [vmem:[%s4] sm:$0x1]
      %v135 = vld [vmem:[#allocation2] sm:$0xff]
      %v136 = vld [vmem:[#allocation2 + $0x8] sm:$0xff]
      %v138 = vperm.slane %v134, 0
      %v140 = vadd.f32 %v135, %v138
      %v141 = vadd.f32 %v136, %v138
      %142 = vst.msk [vmem:[#allocation3] sm:$0xff] %vm38, %v140
      %143 = vst.msk [vmem:[#allocation3 + $0x8] sm:$0xff] %vm38, %v141
    $region29: #{tpu_custom_call.1} parent=1 // pred_fallthru
      _
    // Predicated region
    $region30: #{tpu_custom_call.1} parent=1 // pred_check
      _
    $region31: #{tpu_custom_call.1} parent=1 // pred_check_branch
      %145 = sbr.rel (0) target = $region33
    $region32: #{tpu_custom_call.1} parent=1 // pred_region
      %147 = vsyncadd [#allocation4], 0
      %s148 = sshll.u32 [#allocation3], 4
      %s149 = int_to_ptr.vmem [resolvable:$true] %s148
      %s150 = sshll.u32 %s5, 4
      %s151 = int_to_ptr.hbm [resolvable:$true] %s150
      %156 = dma.vmem_to_hbm [thread:$0]  %s149, 256, %s151, [#allocation4], 128, 128, 8
    $region33: #{tpu_custom_call.1} parent=1 // pred_fallthru
      _
    // Predicated region
    $region34: #{tpu_custom_call.1} parent=1 // pred_check
      _
    $region35: #{tpu_custom_call.1} parent=1 // pred_check_branch
      %158 = sbr.rel (0) target = $region37
    $region36: #{tpu_custom_call.1} parent=1 // pred_region
      %160 = dma.done [#allocation4], 256
    $region37: #{tpu_custom_call.1} parent=1 // pred_fallthru
      _
    %161 = vsyncpa [#allocation4], 1

</llo_original>
